<compile_context>
chip_gen: v6e
topology: v6e:2x2x1
jax: 0.10.0
libtpu: 0.0.40
codegen_flags: <defaults>
</compile_context>

<pallas_src>
from functools import partial

import jax
import jax.numpy as jnp
from jax import lax
from jax.experimental import pallas as pl
from jax.experimental.pallas import tpu as pltpu

_BN_EPS = 1e-5


# ---------------------------------------------------------------------------
# Hardware / tiling heuristics
# ---------------------------------------------------------------------------

def _tpu_config():
    """(generation, physical VMEM bytes) - best effort, with safe fallbacks."""
    gen = "other"
    try:
        kind = jax.devices()[0].device_kind.lower()
        if "v5" in kind:
            gen = "v5e"
        if "v6" in kind:
            gen = "v6e"
        if "v7" in kind or "7x" in kind:
            gen = "v7x"
    except Exception:
        pass
    vmem_phys = 128 * 1024 * 1024 if gen in ("v5e", "v6e") else 64 * 1024 * 1024
    try:
        vmem_phys = int(pltpu.get_tpu_info().vmem_capacity_bytes)
    except Exception:
        pass
    return gen, vmem_phys


def _foot_budget(gen):
    """Per-grid-step VMEM footprint budget (pipeline buffers + f32 temps)."""
    if gen == "v7x":
        return 28 * 1024 * 1024       # 64 MiB physical per TC -> leave headroom
    if gen in ("v5e", "v6e"):
        return 56 * 1024 * 1024       # 128 MiB physical, single TC -> big tiles
    return 24 * 1024 * 1024           # unknown chip: conservative


def _vmem_limit(foot_bytes, gen, vmem_phys):
    cap = 48 * 1024 * 1024 if gen in ("v7x", "other") else 96 * 1024 * 1024
    cap = min(cap, (vmem_phys * 3) // 4)
    return int(min(cap, max(32 * 1024 * 1024, foot_bytes + 4 * 1024 * 1024)))


def _choose_feature_tile(n, d, itemsize, gen):
    """Feature tile width (multiple of 128 lanes) for the single-phase kernel."""
    m = -(-d // 128)                                   # 128-lane columns (ceil)
    # Per 128-lane column, per step: 2x in + 2x out pipeline buffers (native dtype)
    # plus ~2 block-sized f32 temporaries inside the kernel.
    col_foot = 128 * n * (4 * itemsize + 2 * 4)
    k_budget = max(1, _foot_budget(gen) // col_foot)
    k_max = min(m, k_budget)
    if gen != "v7x":
        # Single TensorCore: the largest tile that fits sits closest to HBM roofline.
        return 128 * k_max
    # Dual-TC v7x: aim for >=4 grid steps (>=2 per core, so DMA/compute overlap),
    # preferring an even step count so both cores stay balanced.
    target = min(m, 4)
    k = min(k_max, max(1, m // target))
    steps = -(-m // k)
    while k > 1 and steps > 1 and steps % 2 == 1:
        k -= 1
        steps = -(-m // k)
    return 128 * k


def _choose_two_phase_tiles(n, d, itemsize, gen):
    """(batch tile, feature tile) for the large-N two-phase path."""
    m = -(-d // 128)
    td = 128 * min(m, 4)
    per_row = td * (4 * itemsize + 2 * 4)
    tn = max(8, (_foot_budget(gen) // per_row) // 8 * 8)
    if tn >= n:
        tn = n
    return tn, td


# ---------------------------------------------------------------------------
# Kernels
# ---------------------------------------------------------------------------

def _fused_norm_kernel(x_ref, ab_ref, o_ref):
    """Single-phase: full batch x one feature tile.  Stats + folded affine + store."""
    x = x_ref[...].astype(jnp.float32)                 # [N, td]
    inv_n = 1.0 / x.shape[0]
    mean = jnp.sum(x, axis=0, keepdims=True) * inv_n   # [1, td]
    msq = jnp.sum(x * x, axis=0, keepdims=True) * inv_n
    var = jnp.maximum(msq - mean * mean, 0.0)          # clamp: one-pass cancellation
    inv_std = lax.rsqrt(var + _BN_EPS)
    k = inv_std * ab_ref[0:1, :]                       # gamma*scale folded
    c = ab_ref[1:2, :] - mean * k                      # beta*scale + bias folded
    o_ref[...] = (x * k + c).astype(o_ref.dtype)


def _stats_kernel(x_ref, stats_ref, *, n_total):
    """Two-phase pass 1: accumulate per-feature sum / sum-of-squares over batch tiles."""
    b = pl.program_id(1)

    @pl.when(b == 0)
    def _():
        stats_ref[...] = jnp.zeros_like(stats_ref)

    x = x_ref[...].astype(jnp.float32)                 # [tn, td]
    rows = lax.broadcasted_iota(jnp.int32, x.shape, 0) + b * x.shape[0]
    x = jnp.where(rows < n_total, x, 0.0)              # mask partial last batch tile
    stats_ref[0:1, :] += jnp.sum(x, axis=0, keepdims=True)
    stats_ref[1:2, :] += jnp.sum(x * x, axis=0, keepdims=True)


def _apply_kernel(x_ref, kc_ref, o_ref):
    """Two-phase pass 2: y = x*k + c with precomputed per-feature k, c."""
    x = x_ref[...].astype(jnp.float32)
    o_ref[...] = (x * kc_ref[0:1, :] + kc_ref[1:2, :]).astype(o_ref.dtype)


# ---------------------------------------------------------------------------
# Wrapper
# ---------------------------------------------------------------------------

@partial(jax.jit, static_argnames=("force_two_phase", "two_phase_tiles"))
def learnable_normalization(x, gamma, beta, scale, bias, *,
                            force_two_phase=False, two_phase_tiles=None):
    """Forward of LearnableNormalization: BatchNorm1d (batch stats) then x*scale + bias."""
    orig_shape = x.shape
    n = x.shape[0]
    x2 = x.reshape(n, -1)                              # PyTorch: x.view(batch_size, -1)
    d = x2.shape[1]
    itemsize = x2.dtype.itemsize

    # Fold BN affine (gamma, beta) with the learnable (scale, bias): y = x_hat*A + B.
    a_row = (gamma.astype(jnp.float32) * scale.astype(jnp.float32)).reshape(1, d)
    b_row = (beta.astype(jnp.float32) * scale.astype(jnp.float32)
             + bias.astype(jnp.float32)).reshape(1, d)
    ab = jnp.concatenate([a_row, b_row], axis=0)       # (2, d) f32 - one small DMA/step

    gen, vmem_phys = _tpu_config()
    col_foot = 128 * n * (4 * itemsize + 2 * 4)
    use_two_phase = force_two_phase or (col_foot > _foot_budget(gen))

    if not use_two_phase:
        td = _choose_feature_tile(n, d, itemsize, gen)
        foot = n * td * (4 * itemsize + 2 * 4) + 4 * 2 * td * 4
        x_spec = pl.BlockSpec((n, td), lambda j: (0, j))
        ab_spec = pl.BlockSpec((2, td), lambda j: (0, j))
        out = pl.pallas_call(
            _fused_norm_kernel,
            out_shape=jax.ShapeDtypeStruct((n, d), x2.dtype),
            grid_spec=pltpu.PrefetchScalarGridSpec(
                num_scalar_prefetch=0,
                grid=(pl.cdiv(d, td),),
                in_specs=[x_spec, ab_spec],
                out_specs=x_spec,
            ),
            compiler_params=pltpu.CompilerParams(
                dimension_semantics=("parallel",),
                vmem_limit_bytes=_vmem_limit(foot, gen, vmem_phys),
            ),
        )(x2, ab)
        return out.reshape(orig_shape)

    # ------------------------------------------------------------------
    # Large-N path: batch-tiled stats accumulation, then a separate apply pass.
    # ------------------------------------------------------------------
    if two_phase_tiles is not None:
        tn, td = two_phase_tiles
    else:
        tn, td = _choose_two_phase_tiles(n, d, itemsize, gen)
    foot = tn * td * (4 * itemsize + 2 * 4) + 8 * td * 4
    vmem_limit = _vmem_limit(foot, gen, vmem_phys)
    fsteps = pl.cdiv(d, td)
    bsteps = pl.cdiv(n, tn)

    stats = pl.pallas_call(
        partial(_stats_kernel, n_total=n),
        out_shape=jax.ShapeDtypeStruct((2, d), jnp.float32),
        grid_spec=pltpu.PrefetchScalarGridSpec(
            num_scalar_prefetch=0,
            grid=(fsteps, bsteps),
            in_specs=[pl.BlockSpec((tn, td), lambda j, b: (b, j))],
            out_specs=pl.BlockSpec((2, td), lambda j, b: (0, j)),
        ),
        compiler_params=pltpu.CompilerParams(
            dimension_semantics=("parallel", "arbitrary"),
            vmem_limit_bytes=vmem_limit,
        ),
    )(x2)

    inv_n = 1.0 / n
    mean = stats[0:1, :] * inv_n                                     # (1, d) f32
    var = jnp.maximum(stats[1:2, :] * inv_n - mean * mean, 0.0)
    inv_std = lax.rsqrt(var + _BN_EPS)
    k_row = inv_std * ab[0:1, :]
    c_row = ab[1:2, :] - mean * k_row
    kc = jnp.concatenate([k_row, c_row], axis=0)                     # (2, d) f32

    out = pl.pallas_call(
        _apply_kernel,
        out_shape=jax.ShapeDtypeStruct((n, d), x2.dtype),
        grid_spec=pltpu.PrefetchScalarGridSpec(
            num_scalar_prefetch=0,
            grid=(bsteps, fsteps),
            in_specs=[pl.BlockSpec((tn, td), lambda i, j: (i, j)),
                      pl.BlockSpec((2, td), lambda i, j: (0, j))],
            out_specs=pl.BlockSpec((tn, td), lambda i, j: (i, j)),
        ),
        compiler_params=pltpu.CompilerParams(
            dimension_semantics=("parallel", "parallel"),
            vmem_limit_bytes=vmem_limit,
        ),
    )(x2, kc)
    return out.reshape(orig_shape)


# ---------------------------------------------------------------------------
# Reference + tests
# ---------------------------------------------------------------------------

def _reference(x, gamma, beta, scale, bias):
    n = x.shape[0]
    x2 = x.reshape(n, -1).astype(jnp.float32)
    mean = jnp.mean(x2, axis=0, keepdims=True)
    var = jnp.mean((x2 - mean) ** 2, axis=0, keepdims=True)
    xh = (x2 - mean) / jnp.sqrt(var + _BN_EPS)
    y = xh * gamma.astype(jnp.float32) + beta.astype(jnp.float32)
    y = y * scale.astype(jnp.float32) + bias.astype(jnp.float32)
    return y.reshape(x.shape).astype(x.dtype)


if __name__ == "__main__":
    key = jax.random.PRNGKey(0)
    kx, kg, kb, ks, kc = jax.random.split(key, 5)

    # 1) Main case: 2-D input, non-trivial params (exercise the folded affine).
    batch, embedding_dim = 8, 256
    x = jax.random.normal(kx, (batch, embedding_dim), dtype=jnp.float32)
    gamma = 1.0 + 0.1 * jax.random.normal(kg, (embedding_dim,), jnp.float32)  # bn.weight
    beta = 0.1 * jax.random.normal(kb, (embedding_dim,), jnp.float32)         # bn.bias
    scale = 1.0 + 0.1 * jax.random.normal(ks, (embedding_dim,), jnp.float32)  # self.scale
    bias = 0.1 * jax.random.normal(kc, (embedding_dim,), jnp.float32)         # self.bias

    out = jax.block_until_ready(learnable_normalization(x, gamma, beta, scale, bias))
    ref = _reference(x, gamma, beta, scale, bias)
    assert out.shape == x.shape and out.dtype == x.dtype
    assert jnp.max(jnp.abs(out - ref)) < 2e-4, "mismatch vs reference (main case)"

    # 2) N-D input path (view -> bn -> view back); middle dims of size 1 as the
    #    PyTorch module implicitly requires for its broadcast to be valid.
    x_nd = x.reshape(batch, 1, embedding_dim)
    out_nd = jax.block_until_ready(learnable_normalization(x_nd, gamma, beta, scale, bias))
    ref_nd = _reference(x_nd, gamma, beta, scale, bias)
    assert out_nd.shape == x_nd.shape
    assert jnp.max(jnp.abs(out_nd - ref_nd)) < 2e-4, "mismatch vs reference (N-D case)"

    # 3) Non-128-multiple D: no wrapper padding, masked partial-block stores.
    d2 = 96
    x_b = jax.random.normal(kx, (4, d2), dtype=jnp.float32)
    g2 = 1.0 + 0.1 * jax.random.normal(kg, (d2,), jnp.float32)
    b2 = 0.1 * jax.random.normal(kb, (d2,), jnp.float32)
    s2 = 1.0 + 0.1 * jax.random.normal(ks, (d2,), jnp.float32)
    c2 = 0.1 * jax.random.normal(kc, (d2,), jnp.float32)
    out_b = jax.block_until_ready(learnable_normalization(x_b, g2, b2, s2, c2))
    ref_b = _reference(x_b, g2, b2, s2, c2)
    assert out_b.shape == x_b.shape
    assert jnp.max(jnp.abs(out_b - ref_b)) < 2e-4, "mismatch vs reference (partial-D case)"

    # 4) Forced two-phase (large-N) path with small tiles: partial batch AND feature
    #    blocks so the masked stats accumulation is actually exercised.
    d3 = 200
    x_c = jax.random.normal(kx, (12, d3), dtype=jnp.float32)
    g3 = 1.0 + 0.1 * jax.random.normal(kg, (d3,), jnp.float32)
    b3 = 0.1 * jax.random.normal(kb, (d3,), jnp.float32)
    s3 = 1.0 + 0.1 * jax.random.normal(ks, (d3,), jnp.float32)
    c3 = 0.1 * jax.random.normal(kc, (d3,), jnp.float32)
    out_c = jax.block_until_ready(
        learnable_normalization(x_c, g3, b3, s3, c3,
                                force_two_phase=True, two_phase_tiles=(8, 128)))
    ref_c = _reference(x_c, g3, b3, s3, c3)
    assert out_c.shape == x_c.shape
    assert jnp.max(jnp.abs(out_c - ref_c)) < 2e-4, "mismatch vs reference (two-phase case)"

    print("KERNEL_OK")
</pallas_src>

<mosaic_0001>
module attributes {stable_mosaic.version = 11 : i64} {
  func.func @_fused_norm_kernel(%arg0: i32, %arg1: memref<8x256xf32, #tpu.memory_space<vmem>>, %arg2: memref<2x256xf32, #tpu.memory_space<vmem>>, %arg3: memref<8x256xf32, #tpu.memory_space<vmem>>) attributes {dimension_semantics = [#tpu.dimension_semantics<parallel>], iteration_bounds = array<i64: 1>, scalar_prefetch = 0 : i64, scratch_operands = 0 : i64, tpu.core_type = #tpu.core_type<tc>, window_params = [{transform_indices = @transform_0, window_bounds = array<i64: 8, 256>}, {transform_indices = @transform_1, window_bounds = array<i64: 2, 256>}, {transform_indices = @transform_2, window_bounds = array<i64: 8, 256>}]} {
    %c0 = arith.constant 0 : index
    %c0_0 = arith.constant 0 : index
    %0 = vector.load %arg1[%c0, %c0_0] : memref<8x256xf32, #tpu.memory_space<vmem>>, vector<8x256xf32>
    %cst = arith.constant dense<0.000000e+00> : vector<256xf32>
    %1 = vector.multi_reduction <add>, %0, %cst [0] : vector<8x256xf32> to vector<256xf32>
    %2 = vector.shape_cast %1 : vector<256xf32> to vector<1x256xf32>
    %cst_1 = arith.constant 1.250000e-01 : f32
    %3 = vector.broadcast %cst_1 : f32 to vector<1x256xf32>
    %4 = arith.mulf %2, %3 : vector<1x256xf32>
    %5 = arith.mulf %0, %0 : vector<8x256xf32>
    %cst_2 = arith.constant dense<0.000000e+00> : vector<256xf32>
    %6 = vector.multi_reduction <add>, %5, %cst_2 [0] : vector<8x256xf32> to vector<256xf32>
    %7 = vector.shape_cast %6 : vector<256xf32> to vector<1x256xf32>
    %cst_3 = arith.constant 1.250000e-01 : f32
    %8 = vector.broadcast %cst_3 : f32 to vector<1x256xf32>
    %9 = arith.mulf %7, %8 : vector<1x256xf32>
    %10 = arith.mulf %4, %4 : vector<1x256xf32>
    %11 = arith.subf %9, %10 : vector<1x256xf32>
    %cst_4 = arith.constant 0.000000e+00 : f32
    %12 = vector.broadcast %cst_4 : f32 to vector<1x256xf32>
    %13 = arith.maximumf %11, %12 : vector<1x256xf32>
    %cst_5 = arith.constant 9.99999974E-6 : f32
    %14 = vector.broadcast %cst_5 : f32 to vector<1x256xf32>
    %15 = arith.addf %13, %14 : vector<1x256xf32>
    %16 = math.rsqrt %15 : vector<1x256xf32>
    %c0_6 = arith.constant 0 : index
    %c0_7 = arith.constant 0 : index
    %17 = vector.load %arg2[%c0_6, %c0_7] : memref<2x256xf32, #tpu.memory_space<vmem>>, vector<1x256xf32>
    %18 = arith.mulf %16, %17 : vector<1x256xf32>
    %c1 = arith.constant 1 : index
    %c0_8 = arith.constant 0 : index
    %19 = vector.load %arg2[%c1, %c0_8] : memref<2x256xf32, #tpu.memory_space<vmem>>, vector<1x256xf32>
    %20 = arith.mulf %4, %18 : vector<1x256xf32>
    %21 = arith.subf %19, %20 : vector<1x256xf32>
    %22 = vector.broadcast %18 : vector<1x256xf32> to vector<8x256xf32>
    %23 = arith.mulf %0, %22 : vector<8x256xf32>
    %24 = vector.broadcast %21 : vector<1x256xf32> to vector<8x256xf32>
    %25 = arith.addf %23, %24 : vector<8x256xf32>
    %c0_9 = arith.constant 0 : index
    %c0_10 = arith.constant 0 : index
    %26 = vector.load %arg3[%c0_9, %c0_10] : memref<8x256xf32, #tpu.memory_space<vmem>>, vector<8x256xf32>
    tpu.vector_store %arg3[%c0_9, %c0_10], %25 {strides = array<i32>} : memref<8x256xf32, #tpu.memory_space<vmem>>, vector<8x256xf32>,
    return
  }
  func.func @transform_0(%arg0: i32) -> (i32, i32) {
    %c0_i32 = arith.constant 0 : i32
    %c0_i32_0 = arith.constant 0 : i32
    return %c0_i32, %arg0 : i32, i32
  }
  func.func @transform_1(%arg0: i32) -> (i32, i32) {
    %c0_i32 = arith.constant 0 : i32
    %c0_i32_0 = arith.constant 0 : i32
    return %c0_i32, %arg0 : i32, i32
  }
  func.func @transform_2(%arg0: i32) -> (i32, i32) {
    %c0_i32 = arith.constant 0 : i32
    %c0_i32_0 = arith.constant 0 : i32
    return %c0_i32, %arg0 : i32, i32
  }
}

</mosaic_0001>

<llo_original>
// kernel: learnable_normalization.1
$region0: #{learnable_normalization.1}
  #allocation0 [shape = 'u32[]', space=smem, size = 0x4, offset = 0x4, fixed_abs, tag = 'smem constant byte address 0x4 - core index']
  #allocation1 [shape = 'u32[144,128]{1,0:T(1,128)}', space=vmem, size = 0x12000, scoped, tag = 'internal scratch']
  %s0 = inlined_call_operand.vmem [shape: f32[8,256], index: 0, kind: input, shape index: {}]
  %s1 = inlined_call_operand.vmem [shape: f32[2,256], index: 1, kind: input, shape index: {}]
  %s2 = inlined_call_operand.hbm [shape: f32[8,256], index: 2, kind: output, shape index: {}]
  %s3 = sld [smem:[#allocation0]]
  $region18: #{learnable_normalization.1} parent=0
    _
  %s5 = ssub.s32 1, %s3
  %s6 = scalar_select 0, %s5, %s3
  $region1: #{learnable_normalization.1} parent=0
    #allocation2 [shape = 'u8[8192]{0}', space=vmem, size = 0x2000, scoped, tag = 'output window, operand 0, single buffered']
    #allocation3 [shape = 's32[1]{0}', space=sflag, size = 0x4, scoped, tag = 'scoped memory for learnable_normalization.1']
    %7 = vsyncpa [#allocation3], 0
    // Predicated region
    $region2: #{learnable_normalization.1} parent=1 // pred_check
      _
    $region3: #{learnable_normalization.1} parent=1 // pred_check_branch
      %9 = sbr.rel (0) target = $region5
    $region4: #{learnable_normalization.1} parent=1 // pred_region
      _
    $region5: #{learnable_normalization.1} parent=1 // pred_fallthru
      _
    // Predicated region
    $region6: #{learnable_normalization.1} parent=1 // pred_check
      _
    $region7: #{learnable_normalization.1} parent=1 // pred_check_branch
      %11 = sbr.rel (0) target = $region9
    $region8: #{learnable_normalization.1} parent=1 // pred_region
      _
    $region9: #{learnable_normalization.1} parent=1 // pred_fallthru
      _
    %v12 = vld [vmem:[%s0] sm:$0xff]
    %v13 = vld [vmem:[%s0 + $0x8] sm:$0xff]
    %v14 = vrot.slane %v12, 4
    %v15 = vadd.f32 %v12, %v14
    %v16 = vrot.slane %v15, 2
    %v17 = vadd.f32 %v15, %v16
    %v18 = vrot.slane %v17, 1
    %v19 = vadd.f32 %v17, %v18
    %v20 = vrot.slane %v13, 4
    %v21 = vadd.f32 %v13, %v20
    %v22 = vrot.slane %v21, 2
    %v23 = vadd.f32 %v21, %v22
    %v24 = vrot.slane %v23, 1
    %v25 = vadd.f32 %v23, %v24
    %v26 = vmul.f32 %v19, 0.125
    %v27 = vmul.f32 %v25, 0.125
    %v28 = vmul.f32 %v12, %v12
    %v29 = vmul.f32 %v13, %v13
    %v30 = vrot.slane %v28, 4
    %v31 = vadd.f32 %v28, %v30
    %v32 = vrot.slane %v31, 2
    %v33 = vadd.f32 %v31, %v32
    %v34 = vrot.slane %v33, 1
    %v35 = vadd.f32 %v33, %v34
    %v36 = vrot.slane %v29, 4
    %v37 = vadd.f32 %v29, %v36
    %v38 = vrot.slane %v37, 2
    %v39 = vadd.f32 %v37, %v38
    %v40 = vrot.slane %v39, 1
    %v41 = vadd.f32 %v39, %v40
    %v42 = vmul.f32 %v35, 0.125
    %v43 = vmul.f32 %v41, 0.125
    %v44 = vmul.f32 %v26, %v26
    %v45 = vmul.f32 %v27, %v27
    %v46 = vsub.f32 %v42, %v44
    %v47 = vsub.f32 %v43, %v45
    %v48 = vmax.f32 %v46, 0.0
    %v49 = vmax.f32 %v47, 0.0
    %v50 = vadd.f32 %v48, 1e-05
    %v51 = vadd.f32 %v49, 1e-05
    %v52 = vrsqrt.pop %v50
    %v53 = vrsqrt.pop %v51
    %v54 = vld [vmem:[%s1] ss:$2 sm:$0x3]
    %v56 = vlaneseq
    %v57 = vshrl.u32 %v56, 7
    %v58 = vsub.s32 0, %v57
    %v59 = vrot.slane %v54, %v58
    %v60 = vlaneseq
    %v61 = vshrl.u32 %v60, 7
    %v62 = vsub.s32 1, %v61
    %v63 = vrot.slane %v54, %v62
    %v66 = vmul.f32 %v52, %v59
    %v67 = vmul.f32 %v53, %v63
    %s68 = scalar_lea.vmem %s1, 1
    %v69 = vld [vmem:[%s68] ss:$2 sm:$0x3]
    %v70 = vmul.f32 %v26, %v66
    %v71 = vmul.f32 %v27, %v67
    %v74 = vcombine.low %v70, %v71
    %v76 = vunpack.c.l.s4 1966171168
    %v77 = vunpack.c.0.s8 %v76
    %v78 = vlaneseq
    %v79 = vshrl.u32 %v78, 7
    %v80 = vsub.s32 %v77, %v79
    %v81 = vrot.slane %v74, %v80
    %v83 = vunpack.c.l.s4 1966171168
    %v84 = vunpack.c.0.s8 %v83
    %v85 = vlaneseq
    %v86 = vshrl.u32 %v85, 7
    %v87 = vsub.s32 %v84, %v86
    %v88 = vrot.slane %v81, %v87
    %v90 = vsub.f32 %v69, %v88
    %v91 = vlaneseq
    %v92 = vshrl.u32 %v91, 7
    %v93 = vsub.s32 0, %v92
    %v94 = vrot.slane %v66, %v93
    %v95 = vlaneseq
    %v96 = vshrl.u32 %v95, 7
    %v97 = vsub.s32 0, %v96
    %v98 = vrot.slane %v67, %v97
    %v99 = vmul.f32 %v12, %v94
    %v100 = vmul.f32 %v13, %v98
    %v102 = vlaneseq
    %v103 = vshrl.u32 %v102, 7
    %v104 = vsub.s32 0, %v103
    %v105 = vrot.slane %v90, %v104
    %v106 = vlaneseq
    %v107 = vshrl.u32 %v106, 7
    %v108 = vsub.s32 1, %v107
    %v109 = vrot.slane %v90, %v108
    %v112 = vadd.f32 %v99, %v105
    %v113 = vadd.f32 %v100, %v109
    %114 = vst [vmem:[#allocation2] sm:$0xff] %v112
    %115 = vst [vmem:[#allocation2 + $0x8] sm:$0xff] %v113
    // Predicated region
    $region10: #{learnable_normalization.1} parent=1 // pred_check
      _
    $region11: #{learnable_normalization.1} parent=1 // pred_check_branch
      %117 = sbr.rel (0) target = $region13
    $region12: #{learnable_normalization.1} parent=1 // pred_region
      %s119 = ssub.s32 256, 256
      %120 = vsyncadd [#allocation3], %s119
      %s122 = sshll.u32 [#allocation2], 4
      %s123 = int_to_ptr.vmem [resolvable:$true] %s122
      %125 = dma.vmem_to_hbm [thread:$0]  %s123, 256, %s2, [#allocation3]
    $region13: #{learnable_normalization.1} parent=1 // pred_fallthru
      _
    // Predicated region
    $region14: #{learnable_normalization.1} parent=1 // pred_check
      _
    $region15: #{learnable_normalization.1} parent=1 // pred_check_branch
      %127 = sbr.rel (0) target = $region17
    $region16: #{learnable_normalization.1} parent=1 // pred_region
      %128 = dma.done [#allocation3], 256
    $region17: #{learnable_normalization.1} parent=1 // pred_fallthru
      _
    %129 = vsyncpa [#allocation3], 1

</llo_original>
